<compile_context>
chip_gen: v7x
topology: tpu7x:2x2x1
jax: 0.10.0
libtpu: 0.0.40
codegen_flags: <defaults>
</compile_context>

<pallas_src>
import functools
import math

import jax
import jax.numpy as jnp
from jax.experimental import pallas as pl
from jax.experimental.pallas import tpu as pltpu


# ---------------------------- tiling helpers ----------------------------

def _tile(dim, target, align):
    """Largest multiple of `align` that divides `dim` and is <= target.

    Falls back to the full dimension (which always satisfies the Mosaic
    (8, 128)-or-full-dim block constraint)."""
    t = min(dim, target)
    t = (t // align) * align
    while t >= align:
        if dim % t == 0:
            return t
        t -= align
    return dim


def _heads_per_group(n_heads, head_dim):
    """Smallest group of heads whose fused width is 128-lane aligned."""
    for hpg in range(1, n_heads + 1):
        if n_heads % hpg == 0 and (hpg * head_dim) % 128 == 0:
            return hpg
    return n_heads  # full hidden dim -> "full dim" block exception


# ---------------------------- Pallas kernels ----------------------------

def _matmul_kernel(x_ref, w_ref, b_ref, o_ref, acc_ref, *, activation):
    """Tiled matmul with f32 accumulator; bias (+GELU) fused into last-k epilogue."""
    k = pl.program_id(2)

    @pl.when(k == 0)
    def _():
        acc_ref[...] = jnp.zeros_like(acc_ref)

    acc_ref[...] += jnp.dot(x_ref[...], w_ref[...],
                            preferred_element_type=jnp.float32)

    @pl.when(k == pl.num_programs(2) - 1)
    def _():
        y = acc_ref[...] + b_ref[...].astype(jnp.float32)
        if activation == "gelu":
            # TODO(synk): HF BERT uses erf-GELU; tanh approximation used here.
            y = 0.5 * y * (1.0 + jnp.tanh(
                0.7978845608028654 * (y + 0.044715 * y * y * y)))
        o_ref[...] = y.astype(o_ref.dtype)


def linear(x, w, b, activation=None, out_dtype=None, tm=512, tn=512, tk=512):
    """x: (M, K) @ w: (K, N) + b: (N,), fused bias (+ optional GELU)."""
    M, K = x.shape
    Kw, N = w.shape
    assert K == Kw
    out_dtype = out_dtype or x.dtype
    btm = _tile(M, tm, 8)
    btn = _tile(N, tn, 128)
    btk = _tile(K, tk, 128)
    return pl.pallas_call(
        functools.partial(_matmul_kernel, activation=activation),
        out_shape=jax.ShapeDtypeStruct((M, N), out_dtype),
        grid=(M // btm, N // btn, K // btk),
        in_specs=[
            pl.BlockSpec((btm, btk), lambda i, j, k: (i, k)),
            pl.BlockSpec((btk, btn), lambda i, j, k: (k, j)),
            pl.BlockSpec((1, btn), lambda i, j, k: (0, j)),
        ],
        out_specs=pl.BlockSpec((btm, btn), lambda i, j, k: (i, j)),
        scratch_shapes=[pltpu.VMEM((btm, btn), jnp.float32)],
        compiler_params=pltpu.CompilerParams(
            dimension_semantics=("parallel", "parallel", "arbitrary")),
    )(x, w, b.reshape(1, N))


def _matmul_res_ln_kernel(x_ref, w_ref, b_ref, r_ref, g_ref, bb_ref,
                          o_ref, acc_ref, *, eps):
    """Tiled matmul; epilogue = bias + residual add + LayerNorm (over full N)."""
    k = pl.program_id(1)

    @pl.when(k == 0)
    def _():
        acc_ref[...] = jnp.zeros_like(acc_ref)

    acc_ref[...] += jnp.dot(x_ref[...], w_ref[...],
                            preferred_element_type=jnp.float32)

    @pl.when(k == pl.num_programs(1) - 1)
    def _():
        y = (acc_ref[...] + b_ref[...].astype(jnp.float32)
             + r_ref[...].astype(jnp.float32))
        mu = jnp.mean(y, axis=-1, keepdims=True)
        var = jnp.mean((y - mu) ** 2, axis=-1, keepdims=True)
        yn = (y - mu) * jax.lax.rsqrt(var + eps)
        o_ref[...] = (yn * g_ref[...].astype(jnp.float32)
                      + bb_ref[...].astype(jnp.float32)).astype(o_ref.dtype)


def linear_residual_layernorm(x, w, b, res, gamma, beta, eps=1e-12,
                              out_dtype=None, tm=512, tk=512):
    """(x @ w + b + res) -> LayerNorm over the last dim, fused in one kernel."""
    M, K = x.shape
    _, N = w.shape  # N == hidden; LN needs the full hidden dim per output block
    out_dtype = out_dtype or x.dtype
    btm = _tile(M, tm, 8)
    btk = _tile(K, tk, 128)
    return pl.pallas_call(
        functools.partial(_matmul_res_ln_kernel, eps=eps),
        out_shape=jax.ShapeDtypeStruct((M, N), out_dtype),
        grid=(M // btm, K // btk),
        in_specs=[
            pl.BlockSpec((btm, btk), lambda i, k: (i, k)),
            pl.BlockSpec((btk, N), lambda i, k: (k, 0)),
            pl.BlockSpec((1, N), lambda i, k: (0, 0)),
            pl.BlockSpec((btm, N), lambda i, k: (i, 0)),
            pl.BlockSpec((1, N), lambda i, k: (0, 0)),
            pl.BlockSpec((1, N), lambda i, k: (0, 0)),
        ],
        out_specs=pl.BlockSpec((btm, N), lambda i, k: (i, 0)),
        scratch_shapes=[pltpu.VMEM((btm, N), jnp.float32)],
        compiler_params=pltpu.CompilerParams(
            dimension_semantics=("parallel", "arbitrary")),
    )(x, w, b.reshape(1, N), res, gamma.reshape(1, N), beta.reshape(1, N))


def _emb_layernorm_kernel(w_ref, p_ref, t_ref, g_ref, b_ref, o_ref, *, eps):
    """Fused (word + position + type) embedding sum + LayerNorm (f32 math)."""
    x = (w_ref[...].astype(jnp.float32)
         + p_ref[...].astype(jnp.float32)
         + t_ref[...].astype(jnp.float32))
    mu = jnp.mean(x, axis=-1, keepdims=True)
    var = jnp.mean((x - mu) ** 2, axis=-1, keepdims=True)
    y = (x - mu) * jax.lax.rsqrt(var + eps)
    o_ref[...] = (y * g_ref[...].astype(jnp.float32)
                  + b_ref[...].astype(jnp.float32)).astype(o_ref.dtype)


def embedding_layernorm(word_e, pos_e, type_e, gamma, beta, eps=1e-12,
                        out_dtype=jnp.bfloat16, tm=512):
    """All inputs (M, H) bf16; returns LayerNorm(word+pos+type) in out_dtype."""
    M, H = word_e.shape
    btm = _tile(M, tm, 8)
    spec_mh = pl.BlockSpec((btm, H), lambda i: (i, 0))
    spec_1h = pl.BlockSpec((1, H), lambda i: (0, 0))
    return pl.pallas_call(
        functools.partial(_emb_layernorm_kernel, eps=eps),
        out_shape=jax.ShapeDtypeStruct((M, H), out_dtype),
        grid=(M // btm,),
        in_specs=[spec_mh, spec_mh, spec_mh, spec_1h, spec_1h],
        out_specs=spec_mh,
        compiler_params=pltpu.CompilerParams(dimension_semantics=("parallel",)),
    )(word_e, pos_e, type_e, gamma.reshape(1, H), beta.reshape(1, H))


def _attention_kernel(qkv_ref, o_ref, *, heads_per_group, head_dim):
    """Self-attention for one batch element and one head group.

    qkv_ref: (1, S, 3 * heads_per_group * head_dim), bf16, columns laid out
    per head as [Qh | Kh | Vh]; Q is pre-scaled by 1/sqrt(head_dim) at init.
    """
    Dh = head_dim
    outs = []
    for j in range(heads_per_group):                 # small static unroll (<= 2 heads typ.)
        base = j * 3 * Dh
        qh = qkv_ref[0, :, base:base + Dh]           # (S, Dh) bf16
        kh = qkv_ref[0, :, base + Dh:base + 2 * Dh]  # (S, Dh) bf16
        vh = qkv_ref[0, :, base + 2 * Dh:base + 3 * Dh]
        # contract last dims of both operands (no explicit kh.T / XLU transpose)
        s = jax.lax.dot_general(qh, kh, (((1,), (1,)), ((), ())),
                                preferred_element_type=jnp.float32)   # (S, S) f32
        m = jnp.max(s, axis=-1, keepdims=True)
        p = jnp.exp(s - m)
        p = p * pl.reciprocal(jnp.sum(p, axis=-1, keepdims=True), approx=True)
        outs.append(jnp.dot(p.astype(vh.dtype), vh,
                            preferred_element_type=jnp.float32))      # (S, Dh) f32
    out = outs[0] if heads_per_group == 1 else jnp.concatenate(outs, axis=-1)
    o_ref[...] = out[None, :, :].astype(o_ref.dtype)  # single lane-dense store


def attention(qkv, n_heads, head_dim, heads_per_group, out_dtype=None):
    """qkv: (B, S, 3H) with per-head column layout [Qh|Kh|Vh]. Returns (B, S, H)."""
    B, S, H3 = qkv.shape
    H = n_heads * head_dim
    assert H3 == 3 * H
    Dg = heads_per_group * head_dim
    n_groups = n_heads // heads_per_group
    out_dtype = out_dtype or qkv.dtype
    # TODO(synk): for long sequences (S >= 512) convert to a flash-style
    #             online-softmax with a KV grid axis (size tiles for v7x 64 MiB VMEM).
    return pl.pallas_call(
        functools.partial(_attention_kernel,
                          heads_per_group=heads_per_group, head_dim=head_dim),
        out_shape=jax.ShapeDtypeStruct((B, S, H), out_dtype),
        grid=(B, n_groups),
        in_specs=[pl.BlockSpec((1, S, 3 * Dg), lambda b, g: (b, 0, g))],
        out_specs=pl.BlockSpec((1, S, Dg), lambda b, g: (b, 0, g)),
        compiler_params=pltpu.CompilerParams(
            dimension_semantics=("parallel", "parallel")),
    )(qkv)


# ---------------------------- model (glue in JAX) ----------------------------

def init_params(key, *, vocab, max_pos, n_types, hidden, n_layers, n_heads,
                ffn, n_tags):
    std = 0.02
    wdt = jnp.bfloat16  # matmul-operand / activation dtype
    Dh = hidden // n_heads
    scale = 1.0 / math.sqrt(Dh)

    def nrm(k, shape, dtype=wdt):
        return (jax.random.normal(k, shape, dtype=jnp.float32) * std).astype(dtype)

    keys = jax.random.split(key, 4 + n_layers)
    # classifier head padded once to a lane-dense multiple of 128 columns
    npad = ((n_tags + 127) // 128) * 128
    fc_w = nrm(keys[3], (hidden, n_tags))
    params = {
        "word_emb": nrm(keys[0], (vocab, hidden)),
        "pos_emb": nrm(keys[1], (max_pos, hidden)),
        "type_emb": nrm(keys[2], (n_types, hidden)),
        "emb_ln_g": jnp.ones((hidden,), jnp.float32),
        "emb_ln_b": jnp.zeros((hidden,), jnp.float32),
        "fc_w": jnp.zeros((hidden, npad), wdt).at[:, :n_tags].set(fc_w),
        "fc_b": jnp.zeros((npad,), jnp.float32),
        "n_tags": n_tags,
        "layers": [],
    }
    for l in range(n_layers):
        lk = jax.random.split(keys[4 + l], 6)
        wq = nrm(lk[0], (hidden, hidden))
        wk = nrm(lk[1], (hidden, hidden))
        wv = nrm(lk[2], (hidden, hidden))
        # fused QKV projection, per-head column layout [Qh | Kh | Vh] so one head
        # group is a contiguous 128-lane-aligned column slab; the 1/sqrt(Dh)
        # attention scale is folded into Wq (exactly equivalent, zero runtime cost).
        cols, bcols = [], []
        for h in range(n_heads):
            sl = slice(h * Dh, (h + 1) * Dh)
            cols += [wq[:, sl] * scale, wk[:, sl], wv[:, sl]]
            bcols += [jnp.zeros((Dh,), jnp.float32)] * 3
        params["layers"].append({
            "w_qkv": jnp.concatenate(cols, axis=1),
            "b_qkv": jnp.concatenate(bcols, axis=0),
            "wo": nrm(lk[3], (hidden, hidden)),
            "bo": jnp.zeros((hidden,), jnp.float32),
            "ln1_g": jnp.ones((hidden,), jnp.float32),
            "ln1_b": jnp.zeros((hidden,), jnp.float32),
            "w1": nrm(lk[4], (hidden, ffn)), "b1": jnp.zeros((ffn,), jnp.float32),
            "w2": nrm(lk[5], (ffn, hidden)), "b2": jnp.zeros((hidden,), jnp.float32),
            "ln2_g": jnp.ones((hidden,), jnp.float32),
            "ln2_b": jnp.zeros((hidden,), jnp.float32),
        })
    return params


def encoder_layer(h, p, B, S, n_heads):
    """h: (B*S, H) bf16 -> (B*S, H) bf16. One BERT transformer block."""
    H = h.shape[-1]
    Dh = H // n_heads
    hpg = _heads_per_group(n_heads, Dh)
    qkv = linear(h, p["w_qkv"], p["b_qkv"])                        # (B*S, 3H)
    a = attention(qkv.reshape(B, S, 3 * H), n_heads, Dh, hpg).reshape(B * S, H)
    # attention output projection + residual + LayerNorm (fused)
    h = linear_residual_layernorm(a, p["wo"], p["bo"], h, p["ln1_g"], p["ln1_b"])
    f = linear(h, p["w1"], p["b1"], activation="gelu")             # (B*S, FFN)
    # FFN down-projection + residual + LayerNorm (fused)
    h = linear_residual_layernorm(f, p["w2"], p["b2"], h, p["ln2_g"], p["ln2_b"])
    return h


def classifier_head(h, fc_w, fc_b, n_tags):
    """fc head; weight is already padded to a lane-dense 128-wide output at init."""
    out = linear(h, fc_w, fc_b, out_dtype=jnp.float32)
    return out[:, :n_tags]


def bert_classification_forward(params, x, seg=None, *, n_heads, cls_only=False):
    """Mirrors BERTClassification.forward(x, seg)."""
    B, S = x.shape
    if seg is None:
        seg = jnp.zeros_like(x)  # matches `seg = torch.zeros_like(x)`
    H = params["word_emb"].shape[-1]
    M = B * S
    # Embedding gathers stay in plain JAX (data-dependent gather glue), in bf16;
    # the word+pos+type sum and LayerNorm are fused into one Pallas kernel.
    word_e = params["word_emb"][x].reshape(M, H)
    type_e = params["type_emb"][seg].reshape(M, H)
    pos_e = jnp.broadcast_to(params["pos_emb"][:S][None], (B, S, H)).reshape(M, H)
    h = embedding_layernorm(word_e, pos_e, type_e,
                            params["emb_ln_g"], params["emb_ln_b"],
                            out_dtype=jnp.bfloat16)
    for p in params["layers"]:
        h = encoder_layer(h, p, B, S, n_heads)
    if cls_only:
        z = h.reshape(B, S, H)[:, 0]                               # (B, H)
        return classifier_head(z, params["fc_w"], params["fc_b"], params["n_tags"])
    out = classifier_head(h, params["fc_w"], params["fc_b"], params["n_tags"])
    return out.reshape(B, S, -1)


if __name__ == "__main__":
    B, S = 2, 8
    VOCAB, MAX_POS, N_TYPES = 128, 64, 2
    HIDDEN, N_LAYERS, N_HEADS, FFN = 32, 2, 4, 64
    N_TAGS = 5

    key = jax.random.PRNGKey(0)
    pkey, xkey = jax.random.split(key)
    params = init_params(pkey, vocab=VOCAB, max_pos=MAX_POS, n_types=N_TYPES,
                         hidden=HIDDEN, n_layers=N_LAYERS, n_heads=N_HEADS,
                         ffn=FFN, n_tags=N_TAGS)
    x = jax.random.randint(xkey, (B, S), 0, VOCAB, dtype=jnp.int32)

    out = bert_classification_forward(params, x, seg=None,
                                      n_heads=N_HEADS, cls_only=False)
    out = jax.block_until_ready(out)
    assert out.shape == (B, S, N_TAGS), out.shape
    assert bool(jnp.all(jnp.isfinite(out)))
    print("KERNEL_OK")
</pallas_src>

<mosaic_0001>
module attributes {stable_mosaic.version = 11 : i64} {
  func.func @_emb_layernorm_kernel(%arg0: i32, %arg1: memref<16x32xbf16, #tpu.memory_space<vmem>>, %arg2: memref<16x32xbf16, #tpu.memory_space<vmem>>, %arg3: memref<16x32xbf16, #tpu.memory_space<vmem>>, %arg4: memref<1x32xf32, #tpu.memory_space<vmem>>, %arg5: memref<1x32xf32, #tpu.memory_space<vmem>>, %arg6: memref<16x32xbf16, #tpu.memory_space<vmem>>) attributes {dimension_semantics = [#tpu.dimension_semantics<parallel>], iteration_bounds = array<i64: 1>, scalar_prefetch = 0 : i64, scratch_operands = 0 : i64, tpu.core_type = #tpu.core_type<tc>, window_params = [{transform_indices = @transform_0, window_bounds = array<i64: 16, 32>}, {transform_indices = @transform_1, window_bounds = array<i64: 16, 32>}, {transform_indices = @transform_2, window_bounds = array<i64: 16, 32>}, {pipeline_mode = #tpu.pipeline_mode<synchronous>, transform_indices = @transform_3, window_bounds = array<i64: 1, 32>}, {pipeline_mode = #tpu.pipeline_mode<synchronous>, transform_indices = @transform_4, window_bounds = array<i64: 1, 32>}, {transform_indices = @transform_5, window_bounds = array<i64: 16, 32>}]} {
    %c0 = arith.constant 0 : index
    %c0_0 = arith.constant 0 : index
    %0 = vector.load %arg1[%c0, %c0_0] : memref<16x32xbf16, #tpu.memory_space<vmem>>, vector<16x32xbf16>
    %1 = arith.extf %0 : vector<16x32xbf16> to vector<16x32xf32>
    %c0_1 = arith.constant 0 : index
    %c0_2 = arith.constant 0 : index
    %2 = vector.load %arg2[%c0_1, %c0_2] : memref<16x32xbf16, #tpu.memory_space<vmem>>, vector<16x32xbf16>
    %3 = arith.extf %2 : vector<16x32xbf16> to vector<16x32xf32>
    %4 = arith.addf %1, %3 : vector<16x32xf32>
    %c0_3 = arith.constant 0 : index
    %c0_4 = arith.constant 0 : index
    %5 = vector.load %arg3[%c0_3, %c0_4] : memref<16x32xbf16, #tpu.memory_space<vmem>>, vector<16x32xbf16>
    %6 = arith.extf %5 : vector<16x32xbf16> to vector<16x32xf32>
    %7 = arith.addf %4, %6 : vector<16x32xf32>
    %cst = arith.constant dense<0.000000e+00> : vector<16xf32>
    %8 = vector.multi_reduction <add>, %7, %cst [1] : vector<16x32xf32> to vector<16xf32>
    %9 = vector.shape_cast %8 : vector<16xf32> to vector<16x1xf32>
    %cst_5 = arith.constant 3.200000e+01 : f32
    %10 = vector.broadcast %cst_5 : f32 to vector<16x1xf32>
    %11 = arith.divf %9, %10 : vector<16x1xf32>
    %12 = vector.broadcast %11 : vector<16x1xf32> to vector<16x32xf32>
    %13 = arith.subf %7, %12 : vector<16x32xf32>
    %14 = arith.mulf %13, %13 : vector<16x32xf32>
    %cst_6 = arith.constant dense<0.000000e+00> : vector<16xf32>
    %15 = vector.multi_reduction <add>, %14, %cst_6 [1] : vector<16x32xf32> to vector<16xf32>
    %16 = vector.shape_cast %15 : vector<16xf32> to vector<16x1xf32>
    %cst_7 = arith.constant 3.200000e+01 : f32
    %17 = vector.broadcast %cst_7 : f32 to vector<16x1xf32>
    %18 = arith.divf %16, %17 : vector<16x1xf32>
    %19 = vector.broadcast %11 : vector<16x1xf32> to vector<16x32xf32>
    %20 = arith.subf %7, %19 : vector<16x32xf32>
    %cst_8 = arith.constant 9.99999996E-13 : f32
    %21 = vector.broadcast %cst_8 : f32 to vector<16x1xf32>
    %22 = arith.addf %18, %21 : vector<16x1xf32>
    %23 = math.rsqrt %22 : vector<16x1xf32>
    %24 = vector.broadcast %23 : vector<16x1xf32> to vector<16x32xf32>
    %25 = arith.mulf %20, %24 : vector<16x32xf32>
    %c0_9 = arith.constant 0 : index
    %c0_10 = arith.constant 0 : index
    %26 = vector.load %arg4[%c0_9, %c0_10] : memref<1x32xf32, #tpu.memory_space<vmem>>, vector<1x32xf32>
    %27 = vector.broadcast %26 : vector<1x32xf32> to vector<16x32xf32>
    %28 = arith.mulf %25, %27 : vector<16x32xf32>
    %c0_11 = arith.constant 0 : index
    %c0_12 = arith.constant 0 : index
    %29 = vector.load %arg5[%c0_11, %c0_12] : memref<1x32xf32, #tpu.memory_space<vmem>>, vector<1x32xf32>
    %30 = vector.broadcast %29 : vector<1x32xf32> to vector<16x32xf32>
    %31 = arith.addf %28, %30 : vector<16x32xf32>
    %32 = arith.truncf %31 : vector<16x32xf32> to vector<16x32xbf16>
    %c0_13 = arith.constant 0 : index
    %c0_14 = arith.constant 0 : index
    %33 = vector.load %arg6[%c0_13, %c0_14] : memref<16x32xbf16, #tpu.memory_space<vmem>>, vector<16x32xbf16>
    tpu.vector_store %arg6[%c0_13, %c0_14], %32 {strides = array<i32>} : memref<16x32xbf16, #tpu.memory_space<vmem>>, vector<16x32xbf16>,
    return
  }
  func.func @transform_0(%arg0: i32) -> (i32, i32) {
    %c0_i32 = arith.constant 0 : i32
    %c0_i32_0 = arith.constant 0 : i32
    return %arg0, %c0_i32 : i32, i32
  }
  func.func @transform_1(%arg0: i32) -> (i32, i32) {
    %c0_i32 = arith.constant 0 : i32
    %c0_i32_0 = arith.constant 0 : i32
    return %arg0, %c0_i32 : i32, i32
  }
  func.func @transform_2(%arg0: i32) -> (i32, i32) {
    %c0_i32 = arith.constant 0 : i32
    %c0_i32_0 = arith.constant 0 : i32
    return %arg0, %c0_i32 : i32, i32
  }
  func.func @transform_3(%arg0: i32) -> (i32, i32) {
    %c0_i32 = arith.constant 0 : i32
    %c0_i32_0 = arith.constant 0 : i32
    %c0_i32_1 = arith.constant 0 : i32
    return %c0_i32, %c0_i32_0 : i32, i32
  }
  func.func @transform_4(%arg0: i32) -> (i32, i32) {
    %c0_i32 = arith.constant 0 : i32
    %c0_i32_0 = arith.constant 0 : i32
    %c0_i32_1 = arith.constant 0 : i32
    return %c0_i32, %c0_i32_0 : i32, i32
  }
  func.func @transform_5(%arg0: i32) -> (i32, i32) {
    %c0_i32 = arith.constant 0 : i32
    %c0_i32_0 = arith.constant 0 : i32
    return %arg0, %c0_i32 : i32, i32
  }
}

</mosaic_0001>

<llo_original>
// kernel: tpu_custom_call.1
$region0: #{tpu_custom_call.1}
  #allocation0 [shape = 'u32[]', space=smem, size = 0x4, offset = 0x4, fixed_abs, tag = 'smem constant byte address 0x4 - core index']
  #allocation1 [shape = 'u32[144,128]{1,0:T(1,128)}', space=vmem, size = 0x12000, scoped, tag = 'internal scratch']
  %s0 = inlined_call_operand.hbm [shape: bf16[16,32], index: 0, kind: input, shape index: {}]
  %s1 = inlined_call_operand.hbm [shape: bf16[16,32], index: 1, kind: input, shape index: {}]
  %s2 = inlined_call_operand.hbm [shape: bf16[16,32], index: 2, kind: input, shape index: {}]
  %s3 = inlined_call_operand.vmem [shape: f32[1,32], index: 3, kind: input, shape index: {}]
  %s4 = inlined_call_operand.vmem [shape: f32[1,32], index: 4, kind: input, shape index: {}]
  %s5 = inlined_call_operand.hbm [shape: bf16[16,32], index: 5, kind: output, shape index: {}]
  %s6 = sld [smem:[#allocation0]]
  $region42: #{tpu_custom_call.1} parent=0
    _
  %s8 = ssub.s32 1, %s6
  %s9 = scalar_select 0, %s8, %s6
  $region1: #{tpu_custom_call.1} parent=0
    #allocation2 [shape = 'u8[4096]{0}', space=vmem, size = 0x1000, scoped, tag = 'input window, operand 0, single buffered']
    #allocation3 [shape = 's32[1]{0}', space=sflag, size = 0x4, scoped, tag = 'scoped memory for tpu_custom_call.1']
    #allocation4 [shape = 's32[1]{0}', space=sflag, size = 0x4, scoped, tag = 'scoped memory for tpu_custom_call.1']
    #allocation5 [shape = 'u8[4096]{0}', space=vmem, size = 0x1000, scoped, tag = 'input window, operand 1, single buffered']
    #allocation6 [shape = 's32[1]{0}', space=sflag, size = 0x4, scoped, tag = 'scoped memory for tpu_custom_call.1']
    #allocation7 [shape = 'u8[4096]{0}', space=vmem, size = 0x1000, scoped, tag = 'input window, operand 2, single buffered']
    #allocation8 [shape = 'u8[4096]{0}', space=vmem, size = 0x1000, scoped, tag = 'output window, operand 0, single buffered']
    %10 = vsyncpa [#allocation3], 0
    %11 = vsyncpa [#allocation6], 0
    %12 = vsyncpa [#allocation4], 0
    // Predicated region
    $region2: #{tpu_custom_call.1} parent=1 // pred_check
      _
    $region3: #{tpu_custom_call.1} parent=1 // pred_check_branch
      %14 = sbr.rel (0) target = $region5
    $region4: #{tpu_custom_call.1} parent=1 // pred_region
      %s16 = ssub.s32 128, 128
      %17 = vsyncadd [#allocation3], %s16
      %s18 = sshll.u32 [#allocation2], 4
      %s19 = int_to_ptr.vmem [resolvable:$true] %s18
      %24 = dma.hbm_to_vmem [thread:$0]  %s0, 128, %s19, [#allocation3], 64, 64, 4
    $region5: #{tpu_custom_call.1} parent=1 // pred_fallthru
      _
    // Predicated region
    $region6: #{tpu_custom_call.1} parent=1 // pred_check
      _
    $region7: #{tpu_custom_call.1} parent=1 // pred_check_branch
      %26 = sbr.rel (0) target = $region9
    $region8: #{tpu_custom_call.1} parent=1 // pred_region
      %s28 = ssub.s32 128, 128
      %29 = vsyncadd [#allocation6], %s28
      %s30 = sshll.u32 [#allocation5], 4
      %s31 = int_to_ptr.vmem [resolvable:$true] %s30
      %36 = dma.hbm_to_vmem [thread:$0]  %s1, 128, %s31, [#allocation6], 64, 64, 4
    $region9: #{tpu_custom_call.1} parent=1 // pred_fallthru
      _
    // Predicated region
    $region10: #{tpu_custom_call.1} parent=1 // pred_check
      _
    $region11: #{tpu_custom_call.1} parent=1 // pred_check_branch
      %38 = sbr.rel (0) target = $region13
    $region12: #{tpu_custom_call.1} parent=1 // pred_region
      %s40 = ssub.s32 128, 128
      %41 = vsyncadd [#allocation6], %s40
      %s42 = sshll.u32 [#allocation7], 4
      %s43 = int_to_ptr.vmem [resolvable:$true] %s42
      %48 = dma.hbm_to_vmem [thread:$0]  %s2, 128, %s43, [#allocation6], 64, 64, 4
    $region13: #{tpu_custom_call.1} parent=1 // pred_fallthru
      _
    // Predicated region
    $region14: #{tpu_custom_call.1} parent=1 // pred_check
      _
    $region15: #{tpu_custom_call.1} parent=1 // pred_check_branch
      %50 = sbr.rel (0) target = $region17
    $region16: #{tpu_custom_call.1} parent=1 // pred_region
      _
    $region17: #{tpu_custom_call.1} parent=1 // pred_fallthru
      _
    // Predicated region
    $region18: #{tpu_custom_call.1} parent=1 // pred_check
      _
    $region19: #{tpu_custom_call.1} parent=1 // pred_check_branch
      %52 = sbr.rel (0) target = $region21
    $region20: #{tpu_custom_call.1} parent=1 // pred_region
      _
    $region21: #{tpu_custom_call.1} parent=1 // pred_fallthru
      _
    // Predicated region
    $region22: #{tpu_custom_call.1} parent=1 // pred_check
      _
    $region23: #{tpu_custom_call.1} parent=1 // pred_check_branch
      %54 = sbr.rel (0) target = $region25
    $region24: #{tpu_custom_call.1} parent=1 // pred_region
      %55 = dma.done [#allocation3], 128
    $region25: #{tpu_custom_call.1} parent=1 // pred_fallthru
      _
    // Predicated region
    $region26: #{tpu_custom_call.1} parent=1 // pred_check
      _
    $region27: #{tpu_custom_call.1} parent=1 // pred_check_branch
      %57 = sbr.rel (0) target = $region29
    $region28: #{tpu_custom_call.1} parent=1 // pred_region
      %58 = dma.done [#allocation6], 128
    $region29: #{tpu_custom_call.1} parent=1 // pred_fallthru
      _
    // Predicated region
    $region30: #{tpu_custom_call.1} parent=1 // pred_check
      _
    $region31: #{tpu_custom_call.1} parent=1 // pred_check_branch
      %60 = sbr.rel (0) target = $region33
    $region32: #{tpu_custom_call.1} parent=1 // pred_region
      %61 = dma.done [#allocation6], 128
    $region33: #{tpu_custom_call.1} parent=1 // pred_fallthru
      _
    %v62 = vld [vmem:[#allocation2] sm:$0xf]
    %v63 = vld [vmem:[#allocation2 + $0x4] sm:$0xf]
    %v64 = vunpack.c.l.bf16 %v62
    %v65 = vunpack.c.l.bf16 %v63
    %v66 = vld [vmem:[#allocation5] sm:$0xf]
    %v67 = vld [vmem:[#allocation5 + $0x4] sm:$0xf]
    %v68 = vunpack.c.l.bf16 %v66
    %v69 = vunpack.c.l.bf16 %v67
    %v70 = vadd.f32 %v64, %v68
    %v71 = vadd.f32 %v65, %v69
    %v72 = vld [vmem:[#allocation7] sm:$0xf]
    %v73 = vld [vmem:[#allocation7 + $0x4] sm:$0xf]
    %v74 = vunpack.c.l.bf16 %v72
    %v75 = vunpack.c.l.bf16 %v73
    %v76 = vadd.f32 %v70, %v74
    %v77 = vadd.f32 %v71, %v75
    %vm78 = vcmask 261120
    %v79 = vsel %vm78, %v76, 0.0
    %80 = vadd.xlane.f32.xlu0 %v79
    %v81 = vpop.xlane.xlu0 %80
    %v82 = vsel %vm78, %v77, 0.0
    %83 = vadd.xlane.f32.xlu0 %v82
    %v84 = vpop.xlane.xlu0 %83
    %v85 = vrcp.pop 32.0
    %v86 = vmul.f32 %v81, %v85
    %v87 = vmul.f32 %v84, %v85
    %v88 = vsub.f32 %v76, %v86
    %v89 = vsub.f32 %v77, %v87
    %v90 = vmul.f32 %v88, %v88
    %v91 = vmul.f32 %v89, %v89
    %v92 = vsel %vm78, %v90, 0.0
    %93 = vadd.xlane.f32.xlu0 %v92
    %v94 = vpop.xlane.xlu0 %93
    %v95 = vsel %vm78, %v91, 0.0
    %96 = vadd.xlane.f32.xlu0 %v95
    %v97 = vpop.xlane.xlu0 %96
    %v98 = vmul.f32 %v94, %v85
    %v99 = vmul.f32 %v97, %v85
    %v100 = vadd.f32 %v98, 1e-12
    %v101 = vadd.f32 %v99, 1e-12
    %v102 = vrsqrt.pop %v100
    %v103 = vrsqrt.pop %v101
    %v104 = vmul.f32 %v88, %v102
    %v105 = vmul.f32 %v89, %v103
    %v106 = vld [vmem:[%s3] sm:$0x1]
    %v108 = vlaneseq
    %v109 = vshrl.u32 %v108, 7
    %v110 = vsub.s32 0, %v109
    %v111 = vrot.slane %v106, %v110
    %v113 = vmul.f32 %v104, %v111
    %v114 = vmul.f32 %v105, %v111
    %v115 = vld [vmem:[%s4] sm:$0x1]
    %v117 = vlaneseq
    %v118 = vshrl.u32 %v117, 7
    %v119 = vsub.s32 0, %v118
    %v120 = vrot.slane %v115, %v119
    %v122 = vadd.f32 %v113, %v120
    %v123 = vadd.f32 %v114, %v120
    %v124 = vpack.c.bf16 %v123, %v122
    %v126 = vunpack.c.l.b16 %v124
    %v127 = vunpack.c.h.b16 %v124
    %v128 = vpack.c.b16 %v126, %v126
    %v129 = vpack.c.b16 %v127, %v127
    %vm132 = vcmask 257024
    %133 = vst.msk [vmem:[#allocation8] sm:$0xf] %vm132, %v128
    %134 = vst.msk [vmem:[#allocation8 + $0x4] sm:$0xf] %vm132, %v129
    // Predicated region
    $region34: #{tpu_custom_call.1} parent=1 // pred_check
      _
    $region35: #{tpu_custom_call.1} parent=1 // pred_check_branch
      %136 = sbr.rel (0) target = $region37
    $region36: #{tpu_custom_call.1} parent=1 // pred_region
      %s138 = ssub.s32 128, 128
      %139 = vsyncadd [#allocation4], %s138
      %s140 = sshll.u32 [#allocation8], 4
      %s141 = int_to_ptr.vmem [resolvable:$true] %s140
      %146 = dma.vmem_to_hbm [thread:$0]  %s141, 128, %s5, [#allocation4], 64, 64, 4
    $region37: #{tpu_custom_call.1} parent=1 // pred_fallthru
      _
    // Predicated region
    $region38: #{tpu_custom_call.1} parent=1 // pred_check
      _
    $region39: #{tpu_custom_call.1} parent=1 // pred_check_branch
      %148 = sbr.rel (0) target = $region41
    $region40: #{tpu_custom_call.1} parent=1 // pred_region
      %149 = dma.done [#allocation4], 128
    $region41: #{tpu_custom_call.1} parent=1 // pred_fallthru
      _
    %150 = vsyncpa [#allocation3], 1
    %151 = vsyncpa [#allocation6], 1
    %152 = vsyncpa [#allocation4], 1

</llo_original>
